<compile_context>
chip_gen: v7x
topology: tpu7x:2x2x1
jax: 0.10.0
libtpu: 0.0.40
codegen_flags: <defaults>
</compile_context>

<pallas_src>
import functools

import jax
import jax.numpy as jnp
from jax.experimental import pallas as pl
from jax.experimental.pallas import tpu as pltpu


def _round_up(n, m):
    return ((n + m - 1) // m) * m


def actor_mlp_kernel(x_ref, w1_ref, b1_ref, w2_ref, b2_ref, w3t_ref, b3_ref, o_ref):
    # Layer 1: (TB, obs) @ (obs, 128) on the MXU in bf16, f32 accumulation.
    x_bf = x_ref[...].astype(jnp.bfloat16)
    h1 = jnp.dot(x_bf, w1_ref[...], preferred_element_type=jnp.float32)
    h1 = jnp.maximum(h1 + b1_ref[...], 0.0)

    # Layer 2: (TB, 128) @ (128, 64) on the MXU in bf16, f32 accumulation.
    h2 = jnp.dot(h1.astype(jnp.bfloat16), w2_ref[...],
                 preferred_element_type=jnp.float32)
    h2 = jnp.maximum(h2 + b2_ref[...], 0.0)

    # Layer 3: w3 is passed transposed as (act_dim, 64), kept in f32.
    act_dim = w3t_ref.shape[0]
    if act_dim == 1:
        # N=1 head: VPU multiply + XLU lane reduction (skips a wasted MXU pass).
        out = jnp.sum(h2 * w3t_ref[...], axis=-1, keepdims=True)
    else:
        # Contract the last dims of both operands (MXU-native transposed-RHS matmul).
        out = jax.lax.dot_general(
            h2, w3t_ref[...],
            dimension_numbers=(((1,), (1,)), ((), ())),
            preferred_element_type=jnp.float32)
    out = out + b3_ref[...]
    o_ref[...] = out.astype(o_ref.dtype)


@functools.partial(jax.jit, static_argnames=("tile_b",))
def actor_forward(x, params, *, tile_b=1024):
    """x: (B, obs_dim) float32 -> (B, act_dim) float32."""
    w1, b1, w2, b2, w3, b3 = params
    B, obs_dim = x.shape
    act_dim = w3.shape[1]

    # Batch tile: big enough to pipeline well, small enough for v7x VMEM.
    tb = min(tile_b, _round_up(B, 8))
    Bp = _round_up(B, tb)
    if Bp != B:
        x = jnp.pad(x, ((0, Bp - B), (0, 0)))
    grid = (Bp // tb,)

    # Big-matmul weights in bf16 (f32 accumulation in-kernel); head stays f32.
    w1b = w1.astype(jnp.bfloat16)
    w2b = w2.astype(jnp.bfloat16)
    w3t = w3.T  # (act_dim, 64)

    # Weights/biases: constant index_map -> resident in VMEM across grid steps.
    resident = lambda a: pl.BlockSpec(a.shape, lambda i: (0,) * a.ndim)

    flops = 2 * Bp * (obs_dim * 128 + 128 * 64 + 64 * act_dim)
    bytes_accessed = (Bp * obs_dim * 4 + Bp * act_dim * 4
                      + w1b.size * 2 + w2b.size * 2
                      + (b1.size + b2.size + w3t.size + b3.size) * 4)

    out = pl.pallas_call(
        actor_mlp_kernel,
        out_shape=jax.ShapeDtypeStruct((Bp, act_dim), jnp.float32),
        grid=grid,
        in_specs=[
            pl.BlockSpec((tb, obs_dim), lambda i: (i, 0)),  # x, tiled over batch
            resident(w1b), resident(b1),
            resident(w2b), resident(b2),
            resident(w3t), resident(b3),
        ],
        out_specs=pl.BlockSpec((tb, act_dim), lambda i: (i, 0)),
        compiler_params=pltpu.CompilerParams(
            dimension_semantics=("parallel",),  # megacore sharding on v7x
        ),
        cost_estimate=pl.CostEstimate(
            flops=flops, transcendentals=0, bytes_accessed=bytes_accessed),
    )(x, w1b, b1, w2b, b2, w3t, b3)
    return out[:B]


def init_actor_params(key, obs_dim, act_dim):
    """nn.Linear default init: U(-1/sqrt(fan_in), +1/sqrt(fan_in)).

    Weights are stored transposed relative to PyTorch: (in_features, out_features)."""
    dims = [(obs_dim, 128), (128, 64), (64, act_dim)]
    params = []
    for fan_in, fan_out in dims:
        key, kw, kb = jax.random.split(key, 3)
        bound = 1.0 / jnp.sqrt(jnp.float32(fan_in))
        w = jax.random.uniform(kw, (fan_in, fan_out), jnp.float32, -bound, bound)
        b = jax.random.uniform(kb, (1, fan_out), jnp.float32, -bound, bound)
        params += [w, b]
    return tuple(params)


def actor_reference(x, params):
    w1, b1, w2, b2, w3, b3 = params
    h1 = jnp.maximum(x @ w1 + b1, 0.0)
    h2 = jnp.maximum(h1 @ w2 + b2, 0.0)
    return h2 @ w3 + b3


if __name__ == "__main__":
    key = jax.random.PRNGKey(0)
    k_params, k_x = jax.random.split(key)

    batch, obs_dim, act_dim = 8, 32, 4
    params = init_actor_params(k_params, obs_dim, act_dim)
    x = jax.random.normal(k_x, (batch, obs_dim), jnp.float32)

    out = actor_forward(x, params)
    out = jax.block_until_ready(out)

    ref = actor_reference(x, params)  # f32 reference
    assert out.shape == (batch, act_dim), out.shape
    # bf16 MXU inputs with f32 accumulation -> looser tolerance vs f32 reference.
    assert jnp.allclose(out, ref, atol=2e-2, rtol=2e-2), "mismatch vs reference"

    print("KERNEL_OK")
</pallas_src>

<mosaic_0001>
module attributes {stable_mosaic.version = 11 : i64} {
  func.func @actor_mlp_kernel(%arg0: i32, %arg1: memref<8x32xf32, #tpu.memory_space<vmem>>, %arg2: memref<32x128xbf16, #tpu.memory_space<vmem>>, %arg3: memref<1x128xf32, #tpu.memory_space<vmem>>, %arg4: memref<128x64xbf16, #tpu.memory_space<vmem>>, %arg5: memref<1x64xf32, #tpu.memory_space<vmem>>, %arg6: memref<4x64xf32, #tpu.memory_space<vmem>>, %arg7: memref<1x4xf32, #tpu.memory_space<vmem>>, %arg8: memref<8x4xf32, #tpu.memory_space<vmem>>) attributes {dimension_semantics = [#tpu.dimension_semantics<parallel>], iteration_bounds = array<i64: 1>, scalar_prefetch = 0 : i64, scratch_operands = 0 : i64, tpu.core_type = #tpu.core_type<tc>, window_params = [{transform_indices = @transform_0, window_bounds = array<i64: 8, 32>}, {pipeline_mode = #tpu.pipeline_mode<synchronous>, transform_indices = @transform_1, window_bounds = array<i64: 32, 128>}, {pipeline_mode = #tpu.pipeline_mode<synchronous>, transform_indices = @transform_2, window_bounds = array<i64: 1, 128>}, {pipeline_mode = #tpu.pipeline_mode<synchronous>, transform_indices = @transform_3, window_bounds = array<i64: 128, 64>}, {pipeline_mode = #tpu.pipeline_mode<synchronous>, transform_indices = @transform_4, window_bounds = array<i64: 1, 64>}, {pipeline_mode = #tpu.pipeline_mode<synchronous>, transform_indices = @transform_5, window_bounds = array<i64: 4, 64>}, {pipeline_mode = #tpu.pipeline_mode<synchronous>, transform_indices = @transform_6, window_bounds = array<i64: 1, 4>}, {transform_indices = @transform_7, window_bounds = array<i64: 8, 4>}]} {
    %c0 = arith.constant 0 : index
    %c0_0 = arith.constant 0 : index
    %0 = vector.load %arg1[%c0, %c0_0] : memref<8x32xf32, #tpu.memory_space<vmem>>, vector<8x32xf32>
    %1 = arith.truncf %0 : vector<8x32xf32> to vector<8x32xbf16>
    %c0_1 = arith.constant 0 : index
    %c0_2 = arith.constant 0 : index
    %2 = vector.load %arg2[%c0_1, %c0_2] : memref<32x128xbf16, #tpu.memory_space<vmem>>, vector<32x128xbf16>
    %cst = arith.constant dense<0.000000e+00> : vector<8x128xf32>
    %3 = tpu.matmul %1, %2, %cst {dimension_numbers = #tpu.dot_dimension_numbers<[1], [0], [0], [1], [0, 0, 1, 1], [], []>} : vector<8x32xbf16>, vector<32x128xbf16>, vector<8x128xf32> -> vector<8x128xf32>
    %c0_3 = arith.constant 0 : index
    %c0_4 = arith.constant 0 : index
    %4 = vector.load %arg3[%c0_3, %c0_4] : memref<1x128xf32, #tpu.memory_space<vmem>>, vector<1x128xf32>
    %5 = vector.broadcast %4 : vector<1x128xf32> to vector<8x128xf32>
    %6 = arith.addf %3, %5 : vector<8x128xf32>
    %cst_5 = arith.constant 0.000000e+00 : f32
    %7 = vector.broadcast %cst_5 : f32 to vector<8x128xf32>
    %8 = arith.maximumf %6, %7 : vector<8x128xf32>
    %9 = arith.truncf %8 : vector<8x128xf32> to vector<8x128xbf16>
    %c0_6 = arith.constant 0 : index
    %c0_7 = arith.constant 0 : index
    %10 = vector.load %arg4[%c0_6, %c0_7] : memref<128x64xbf16, #tpu.memory_space<vmem>>, vector<128x64xbf16>
    %cst_8 = arith.constant dense<0.000000e+00> : vector<8x64xf32>
    %11 = tpu.matmul %9, %10, %cst_8 {dimension_numbers = #tpu.dot_dimension_numbers<[1], [0], [0], [1], [0, 0, 1, 1], [], []>} : vector<8x128xbf16>, vector<128x64xbf16>, vector<8x64xf32> -> vector<8x64xf32>
    %c0_9 = arith.constant 0 : index
    %c0_10 = arith.constant 0 : index
    %12 = vector.load %arg5[%c0_9, %c0_10] : memref<1x64xf32, #tpu.memory_space<vmem>>, vector<1x64xf32>
    %13 = vector.broadcast %12 : vector<1x64xf32> to vector<8x64xf32>
    %14 = arith.addf %11, %13 : vector<8x64xf32>
    %cst_11 = arith.constant 0.000000e+00 : f32
    %15 = vector.broadcast %cst_11 : f32 to vector<8x64xf32>
    %16 = arith.maximumf %14, %15 : vector<8x64xf32>
    %c0_12 = arith.constant 0 : index
    %c0_13 = arith.constant 0 : index
    %17 = vector.load %arg6[%c0_12, %c0_13] : memref<4x64xf32, #tpu.memory_space<vmem>>, vector<4x64xf32>
    %cst_14 = arith.constant dense<0.000000e+00> : vector<8x4xf32>
    %18 = tpu.matmul %16, %17, %cst_14 {dimension_numbers = #tpu.dot_dimension_numbers<[1], [1], [0], [0], [0, 0, 1, 0], [], []>} : vector<8x64xf32>, vector<4x64xf32>, vector<8x4xf32> -> vector<8x4xf32>
    %c0_15 = arith.constant 0 : index
    %c0_16 = arith.constant 0 : index
    %19 = vector.load %arg7[%c0_15, %c0_16] : memref<1x4xf32, #tpu.memory_space<vmem>>, vector<1x4xf32>
    %20 = vector.broadcast %19 : vector<1x4xf32> to vector<8x4xf32>
    %21 = arith.addf %18, %20 : vector<8x4xf32>
    %c0_17 = arith.constant 0 : index
    %c0_18 = arith.constant 0 : index
    %22 = vector.load %arg8[%c0_17, %c0_18] : memref<8x4xf32, #tpu.memory_space<vmem>>, vector<8x4xf32>
    tpu.vector_store %arg8[%c0_17, %c0_18], %21 {strides = array<i32>} : memref<8x4xf32, #tpu.memory_space<vmem>>, vector<8x4xf32>,
    return
  }
  func.func @transform_0(%arg0: i32) -> (i32, i32) {
    %c0_i32 = arith.constant 0 : i32
    %c0_i32_0 = arith.constant 0 : i32
    return %arg0, %c0_i32 : i32, i32
  }
  func.func @transform_1(%arg0: i32) -> (i32, i32) {
    %c0_i32 = arith.constant 0 : i32
    %c0_i32_0 = arith.constant 0 : i32
    %c0_i32_1 = arith.constant 0 : i32
    return %c0_i32, %c0_i32_0 : i32, i32
  }
  func.func @transform_2(%arg0: i32) -> (i32, i32) {
    %c0_i32 = arith.constant 0 : i32
    %c0_i32_0 = arith.constant 0 : i32
    %c0_i32_1 = arith.constant 0 : i32
    return %c0_i32, %c0_i32_0 : i32, i32
  }
  func.func @transform_3(%arg0: i32) -> (i32, i32) {
    %c0_i32 = arith.constant 0 : i32
    %c0_i32_0 = arith.constant 0 : i32
    %c0_i32_1 = arith.constant 0 : i32
    return %c0_i32, %c0_i32_0 : i32, i32
  }
  func.func @transform_4(%arg0: i32) -> (i32, i32) {
    %c0_i32 = arith.constant 0 : i32
    %c0_i32_0 = arith.constant 0 : i32
    %c0_i32_1 = arith.constant 0 : i32
    return %c0_i32, %c0_i32_0 : i32, i32
  }
  func.func @transform_5(%arg0: i32) -> (i32, i32) {
    %c0_i32 = arith.constant 0 : i32
    %c0_i32_0 = arith.constant 0 : i32
    %c0_i32_1 = arith.constant 0 : i32
    return %c0_i32, %c0_i32_0 : i32, i32
  }
  func.func @transform_6(%arg0: i32) -> (i32, i32) {
    %c0_i32 = arith.constant 0 : i32
    %c0_i32_0 = arith.constant 0 : i32
    %c0_i32_1 = arith.constant 0 : i32
    return %c0_i32, %c0_i32_0 : i32, i32
  }
  func.func @transform_7(%arg0: i32) -> (i32, i32) {
    %c0_i32 = arith.constant 0 : i32
    %c0_i32_0 = arith.constant 0 : i32
    return %arg0, %c0_i32 : i32, i32
  }
}

</mosaic_0001>

<llo_original>
// kernel: actor_forward.1
$region0: #{actor_forward.1}
  #allocation0 [shape = 'u32[]', space=smem, size = 0x4, offset = 0x4, fixed_abs, tag = 'smem constant byte address 0x4 - core index']
  #allocation1 [shape = 'u32[144,128]{1,0:T(1,128)}', space=vmem, size = 0x12000, scoped, tag = 'internal scratch']
  %s0 = inlined_call_operand.vmem [shape: f32[8,32], index: 0, kind: input, shape index: {}]
  %s1 = inlined_call_operand.vmem [shape: bf16[32,128], index: 1, kind: input, shape index: {}]
  %s2 = inlined_call_operand.vmem [shape: f32[1,128], index: 2, kind: input, shape index: {}]
  %s3 = inlined_call_operand.vmem [shape: bf16[128,64], index: 3, kind: input, shape index: {}]
  %s4 = inlined_call_operand.vmem [shape: f32[1,64], index: 4, kind: input, shape index: {}]
  %s5 = inlined_call_operand.vmem [shape: f32[4,64], index: 5, kind: input, shape index: {}]
  %s6 = inlined_call_operand.vmem [shape: f32[1,4], index: 6, kind: input, shape index: {}]
  %s7 = inlined_call_operand.vmem [shape: f32[8,4], index: 7, kind: output, shape index: {}]
  %s8 = sld [smem:[#allocation0]]
  $region38: #{actor_forward.1} parent=0
    _
  %s10 = ssub.s32 1, %s8
  %s11 = scalar_select 0, %s10, %s8
  // Predicated region
  $region2: #{actor_forward.1} parent=0 // pred_check
    _
  $region3: #{actor_forward.1} parent=0 // pred_check_branch
    %13 = sbr.rel (0) target = $region5
  $region4: #{actor_forward.1} parent=0 // pred_region
    _
  $region5: #{actor_forward.1} parent=0 // pred_fallthru
    _
  // Predicated region
  $region6: #{actor_forward.1} parent=0 // pred_check
    _
  $region7: #{actor_forward.1} parent=0 // pred_check_branch
    %15 = sbr.rel (0) target = $region9
  $region8: #{actor_forward.1} parent=0 // pred_region
    _
  $region9: #{actor_forward.1} parent=0 // pred_fallthru
    _
  // Predicated region
  $region10: #{actor_forward.1} parent=0 // pred_check
    _
  $region11: #{actor_forward.1} parent=0 // pred_check_branch
    %17 = sbr.rel (0) target = $region13
  $region12: #{actor_forward.1} parent=0 // pred_region
    _
  $region13: #{actor_forward.1} parent=0 // pred_fallthru
    _
  // Predicated region
  $region14: #{actor_forward.1} parent=0 // pred_check
    _
  $region15: #{actor_forward.1} parent=0 // pred_check_branch
    %19 = sbr.rel (0) target = $region17
  $region16: #{actor_forward.1} parent=0 // pred_region
    _
  $region17: #{actor_forward.1} parent=0 // pred_fallthru
    _
  // Predicated region
  $region18: #{actor_forward.1} parent=0 // pred_check
    _
  $region19: #{actor_forward.1} parent=0 // pred_check_branch
    %21 = sbr.rel (0) target = $region21
  $region20: #{actor_forward.1} parent=0 // pred_region
    _
  $region21: #{actor_forward.1} parent=0 // pred_fallthru
    _
  // Predicated region
  $region22: #{actor_forward.1} parent=0 // pred_check
    _
  $region23: #{actor_forward.1} parent=0 // pred_check_branch
    %23 = sbr.rel (0) target = $region25
  $region24: #{actor_forward.1} parent=0 // pred_region
    _
  $region25: #{actor_forward.1} parent=0 // pred_fallthru
    _
  // Predicated region
  $region26: #{actor_forward.1} parent=0 // pred_check
    _
  $region27: #{actor_forward.1} parent=0 // pred_check_branch
    %25 = sbr.rel (0) target = $region29
  $region28: #{actor_forward.1} parent=0 // pred_region
    _
  $region29: #{actor_forward.1} parent=0 // pred_fallthru
    _
  %v27 = vld [vmem:[%s0] sm:$0xff]
  %v28 = vpack.c.bf16 %v27, %v27
  %v29 = vld [vmem:[%s1] sm:$0xf]
  %v30 = vld [vmem:[%s1 + $0x4] sm:$0xf]
  %v31 = vld [vmem:[%s1 + $0x8] sm:$0xf]
  %v32 = vld [vmem:[%s1 + $0xc] sm:$0xf]
  %v33 = vld [vmem:[%s2] sm:$0x1]
  %v35 = vlaneseq
  %v36 = vshrl.u32 %v35, 7
  %v37 = vsub.s32 0, %v36
  %v38 = vrot.slane %v33, %v37
  %v44 = vunpack.c.l.b16 %v29
  %v45 = vunpack.c.l.b16 %v30
  %v46 = vunpack.c.l.b16 %v31
  %v47 = vunpack.c.l.b16 %v32
  %v48 = vpack.c.b16 %v45, %v44
  %v49 = vpack.c.b16 %v47, %v46
  %vm52 = vcmask 261120
  %v54 = vsel %vm52, %v28, 0
  %56 = vmatprep.subr.bf16.mxu0 0
  %57 = vmatpush1.bf16.msra.mxu0 %v48
  %58 = vmatprep.subr.bf16.mxu0 0
  %59 = vmatpush1.bf16.msra.mxu0 %v49
  %60 = vmatprep.subr.bf16.mxu0 0
  %61 = vmatpush1.bf16.msra.mxu0 0
  %62 = vmatprep.subr.bf16.mxu0 0
  %63 = vmatpush1.bf16.msra.mxu0 0
  %64 = vmatprep.subr.bf16.mxu0 0
  %65 = vmatpush1.bf16.msra.mxu0 0
  %66 = vmatprep.subr.bf16.mxu0 0
  %67 = vmatpush1.bf16.msra.mxu0 0
  %68 = vmatprep.subr.bf16.mxu0 0
  %69 = vmatpush1.bf16.msra.mxu0 0
  %70 = vmatprep.subr.bf16.mxu0 0
  %71 = vmatpush1.bf16.msra.mxu0 0
  %72 = vmatprep.subr.bf16.mxu0 0
  %73 = vmatpush1.bf16.msra.mxu0 0
  %74 = vmatprep.subr.bf16.mxu0 0
  %75 = vmatpush1.bf16.msra.mxu0 0
  %76 = vmatprep.subr.bf16.mxu0 0
  %77 = vmatpush1.bf16.msra.mxu0 0
  %78 = vmatprep.subr.bf16.mxu0 0
  %79 = vmatpush1.bf16.msra.mxu0 0
  %80 = vmatprep.subr.bf16.mxu0 0
  %81 = vmatpush1.bf16.msra.mxu0 0
  %82 = vmatprep.subr.bf16.mxu0 0
  %83 = vmatpush1.bf16.msra.mxu0 0
  %84 = vmatprep.subr.bf16.mxu0 0
  %85 = vmatpush1.bf16.msra.mxu0 0
  %86 = vmatprep.subr.bf16.mxu0 0
  %87 = vmatpush1.bf16.msra.mxu0 0
  %88 = vmatprep.mubr.bf16.mxu0 0
  %89 = vmatmul.mubr.bf16.gmra.mrb[0].mxu0 %v54
  %v90 = vpop.f32.mrb[0].mxu0
  %v91 = vadd.f32 %v38, %v90
  %v92 = vpop.f32.mrb[0].mxu0
  %v93 = vpop.f32.mrb[0].mxu0
  %v94 = vpop.f32.mrb[0].mxu0
  %95 = vdwg.mxu0
  %v96 = vmax.f32 %v91, 0.0
  %v97 = vpack.c.bf16 %v96, %v96
  %v98 = vld [vmem:[%s3] sm:$0xf]
  %v99 = vld [vmem:[%s3 + $0x4] sm:$0xf]
  %v100 = vld [vmem:[%s3 + $0x8] sm:$0xf]
  %v101 = vld [vmem:[%s3 + $0xc] sm:$0xf]
  %v102 = vld [vmem:[%s3 + $0x10] sm:$0xf]
  %v103 = vld [vmem:[%s3 + $0x14] sm:$0xf]
  %v104 = vld [vmem:[%s3 + $0x18] sm:$0xf]
  %v105 = vld [vmem:[%s3 + $0x1c] sm:$0xf]
  %v106 = vld [vmem:[%s3 + $0x20] sm:$0xf]
  %v107 = vld [vmem:[%s3 + $0x24] sm:$0xf]
  %v108 = vld [vmem:[%s3 + $0x28] sm:$0xf]
  %v109 = vld [vmem:[%s3 + $0x2c] sm:$0xf]
  %v110 = vld [vmem:[%s3 + $0x30] sm:$0xf]
  %v111 = vld [vmem:[%s3 + $0x34] sm:$0xf]
  %v112 = vld [vmem:[%s3 + $0x38] sm:$0xf]
  %v113 = vld [vmem:[%s3 + $0x3c] sm:$0xf]
  %v114 = vld [vmem:[%s4] sm:$0x1]
  %v116 = vlaneseq
  %v117 = vshrl.u32 %v116, 7
  %v118 = vsub.s32 0, %v117
  %v119 = vrot.slane %v114, %v118
  %v137 = vunpack.c.l.b16 %v98
  %v138 = vunpack.c.l.b16 %v99
  %v139 = vunpack.c.l.b16 %v100
  %v140 = vunpack.c.l.b16 %v101
  %v141 = vunpack.c.l.b16 %v102
  %v142 = vunpack.c.l.b16 %v103
  %v143 = vunpack.c.l.b16 %v104
  %v144 = vunpack.c.l.b16 %v105
  %v145 = vunpack.c.l.b16 %v106
  %v146 = vunpack.c.l.b16 %v107
  %v147 = vunpack.c.l.b16 %v108
  %v148 = vunpack.c.l.b16 %v109
  %v149 = vunpack.c.l.b16 %v110
  %v150 = vunpack.c.l.b16 %v111
  %v151 = vunpack.c.l.b16 %v112
  %v152 = vunpack.c.l.b16 %v113
  %v153 = vpack.c.b16 %v138, %v137
  %v154 = vpack.c.b16 %v140, %v139
  %v155 = vpack.c.b16 %v142, %v141
  %v156 = vpack.c.b16 %v144, %v143
  %v157 = vpack.c.b16 %v146, %v145
  %v158 = vpack.c.b16 %v148, %v147
  %v159 = vpack.c.b16 %v150, %v149
  %v160 = vpack.c.b16 %v152, %v151
  %169 = vmatprep.subr.bf16.mxu0 0
  %170 = vmatpush1.bf16.msra.mxu0 %v153
  %171 = vmatprep.subr.bf16.mxu0 0
  %172 = vmatpush1.bf16.msra.mxu0 %v154
  %173 = vmatprep.subr.bf16.mxu0 0
  %174 = vmatpush1.bf16.msra.mxu0 %v155
  %175 = vmatprep.subr.bf16.mxu0 0
  %176 = vmatpush1.bf16.msra.mxu0 %v156
  %177 = vmatprep.subr.bf16.mxu0 0
  %178 = vmatpush1.bf16.msra.mxu0 %v157
  %179 = vmatprep.subr.bf16.mxu0 0
  %180 = vmatpush1.bf16.msra.mxu0 %v158
  %181 = vmatprep.subr.bf16.mxu0 0
  %182 = vmatpush1.bf16.msra.mxu0 %v159
  %183 = vmatprep.subr.bf16.mxu0 0
  %184 = vmatpush1.bf16.msra.mxu0 %v160
  %185 = vmatprep.subr.bf16.mxu0 0
  %186 = vmatpush1.bf16.msra.mxu0 0
  %187 = vmatprep.subr.bf16.mxu0 0
  %188 = vmatpush1.bf16.msra.mxu0 0
  %189 = vmatprep.subr.bf16.mxu0 0
  %190 = vmatpush1.bf16.msra.mxu0 0
  %191 = vmatprep.subr.bf16.mxu0 0
  %192 = vmatpush1.bf16.msra.mxu0 0
  %193 = vmatprep.subr.bf16.mxu0 0
  %194 = vmatpush1.bf16.msra.mxu0 0
  %195 = vmatprep.subr.bf16.mxu0 0
  %196 = vmatpush1.bf16.msra.mxu0 0
  %197 = vmatprep.subr.bf16.mxu0 0
  %198 = vmatpush1.bf16.msra.mxu0 0
  %199 = vmatprep.subr.bf16.mxu0 0
  %200 = vmatpush1.bf16.msra.mxu0 0
  %201 = vmatprep.mubr.bf16.mxu0 0
  %202 = vmatmul.mubr.bf16.gmra.mrb[0].mxu0 %v97
  %v203 = vpop.f32.mrb[0].mxu0
  %v204 = vadd.f32 %v119, %v203
  %v205 = vpop.f32.mrb[0].mxu0
  %v206 = vpop.f32.mrb[0].mxu0
  %v207 = vpop.f32.mrb[0].mxu0
  %208 = vdwg.mxu0
  %v209 = vmax.f32 %v204, 0.0
  %v210 = vld [vmem:[%s5] sm:$0xf]
  %v211 = vld [vmem:[%s6] sm:$0x1]
  %v213 = vlaneseq
  %v214 = vshrl.u32 %v213, 7
  %v215 = vsub.s32 0, %v214
  %v216 = vrot.slane %v211, %v215
  %vm218 = vcmask 523264
  %v220 = vsel %vm218, %v209, 0
  %v223 = vsel %vm218, %v210, 0
  %225 = vmatprep.subr.mxu0 0.0
  %226 = vmatpush1.xpose.msra.mxu0 %v223
  %227 = vmatprep.subr.mxu0 0.0
  %228 = vmatpush1.xpose.msra.mxu0 0.0
  %229 = vmatprep.subr.mxu0 0.0
  %230 = vmatpush1.xpose.msra.mxu0 0.0
  %231 = vmatprep.subr.mxu0 0.0
  %232 = vmatpush1.xpose.msra.mxu0 0.0
  %233 = vmatprep.subr.mxu0 0.0
  %234 = vmatpush1.xpose.msra.mxu0 0.0
  %235 = vmatprep.subr.mxu0 0.0
  %236 = vmatpush1.xpose.msra.mxu0 0.0
  %237 = vmatprep.subr.mxu0 0.0
  %238 = vmatpush1.xpose.msra.mxu0 0.0
  %239 = vmatprep.subr.mxu0 0.0
  %240 = vmatpush1.xpose.msra.mxu0 0.0
  %241 = vmatprep.subr.mxu0 0.0
  %242 = vmatpush1.xpose.msra.mxu0 0.0
  %243 = vmatprep.subr.mxu0 0.0
  %244 = vmatpush1.xpose.msra.mxu0 0.0
  %245 = vmatprep.subr.mxu0 0.0
  %246 = vmatpush1.xpose.msra.mxu0 0.0
  %247 = vmatprep.subr.mxu0 0.0
  %248 = vmatpush1.xpose.msra.mxu0 0.0
  %249 = vmatprep.subr.mxu0 0.0
  %250 = vmatpush1.xpose.msra.mxu0 0.0
  %251 = vmatprep.subr.mxu0 0.0
  %252 = vmatpush1.xpose.msra.mxu0 0.0
  %253 = vmatprep.subr.mxu0 0.0
  %254 = vmatpush1.xpose.msra.mxu0 0.0
  %255 = vmatprep.subr.mxu0 0.0
  %256 = vmatpush1.xpose.msra.mxu0 0.0
  %257 = vmatprep.subr.mxu0 0.0
  %258 = vmatpush1.xpose.msra.mxu0 0.0
  %259 = vmatprep.subr.mxu0 0.0
  %260 = vmatpush1.xpose.msra.mxu0 0.0
  %261 = vmatprep.subr.mxu0 0.0
  %262 = vmatpush1.xpose.msra.mxu0 0.0
  %263 = vmatprep.subr.mxu0 0.0
  %264 = vmatpush1.xpose.msra.mxu0 0.0
  %265 = vmatprep.subr.mxu0 0.0
  %266 = vmatpush1.xpose.msra.mxu0 0.0
  %267 = vmatprep.subr.mxu0 0.0
  %268 = vmatpush1.xpose.msra.mxu0 0.0
  %269 = vmatprep.subr.mxu0 0.0
  %270 = vmatpush1.xpose.msra.mxu0 0.0
  %271 = vmatprep.subr.mxu0 0.0
  %272 = vmatpush1.xpose.msra.mxu0 0.0
  %273 = vmatprep.subr.mxu0 0.0
  %274 = vmatpush1.xpose.msra.mxu0 0.0
  %275 = vmatprep.subr.mxu0 0.0
  %276 = vmatpush1.xpose.msra.mxu0 0.0
  %277 = vmatprep.subr.mxu0 0.0
  %278 = vmatpush1.xpose.msra.mxu0 0.0
  %279 = vmatprep.subr.mxu0 0.0
  %280 = vmatpush1.xpose.msra.mxu0 0.0
  %281 = vmatprep.subr.mxu0 0.0
  %282 = vmatpush1.xpose.msra.mxu0 0.0
  %283 = vmatprep.subr.mxu0 0.0
  %284 = vmatpush1.xpose.msra.mxu0 0.0
  %285 = vmatprep.subr.mxu0 0.0
  %286 = vmatpush1.xpose.msra.mxu0 0.0
  %287 = vmatprep.subr.mxu0 0.0
  %288 = vmatpush1.xpose.msra.mxu0 0.0
  %289 = vmatprep.mubr.f32.mxu0 0.0
  %290 = vmatmul.mubr.f32.gmra.mrb[0].mxu0 %v220
  %v291 = vpop.f32.mrb[0].mxu0
  %v292 = vadd.f32 %v216, %v291
  %v293 = vpop.f32.mrb[0].mxu0
  %294 = vdwg.mxu0
  %vm295 = vcmask 31744
  %296 = vst.msk [vmem:[%s7] sm:$0xff] %vm295, %v292
  // Predicated region
  $region30: #{actor_forward.1} parent=0 // pred_check
    _
  $region31: #{actor_forward.1} parent=0 // pred_check_branch
    %298 = sbr.rel (0) target = $region33
  $region32: #{actor_forward.1} parent=0 // pred_region
    _
  $region33: #{actor_forward.1} parent=0 // pred_fallthru
    _
  // Predicated region
  $region34: #{actor_forward.1} parent=0 // pred_check
    _
  $region35: #{actor_forward.1} parent=0 // pred_check_branch
    %300 = sbr.rel (0) target = $region37
  $region36: #{actor_forward.1} parent=0 // pred_region
    _
  $region37: #{actor_forward.1} parent=0 // pred_fallthru
    _

</llo_original>
